<compile_context>
chip_gen: v5e
topology: v5e:2x2
jax: 0.10.0
libtpu: 0.0.40
codegen_flags: <defaults>
</compile_context>

<pallas_src>
import jax
import jax.numpy as jnp
from jax.experimental import pallas as pl
from jax.experimental.pallas import tpu as pltpu


def _lm_criterion_kernel(logits_ref, tgt_ref, mask_ref, num_ref, den_ref):
    logits = logits_ref[...]                               # (TM, V), input dtype
    tgt = tgt_ref[...]                                     # (TM, 1) int32
    msk = mask_ref[...].astype(jnp.float32)                # (TM, 1) f32

    # Pick logits[row, target[row]] via where-select against a vocab iota.
    # At most one element per row is non-zero, so the sum is exact in any dtype.
    vocab_ids = jax.lax.broadcasted_iota(jnp.int32, logits.shape, dimension=1)
    picked = jnp.where(vocab_ids == tgt, logits, jnp.zeros_like(logits))
    loss = -jnp.sum(picked, axis=-1, keepdims=True).astype(jnp.float32)  # (TM, 1)

    num = jnp.sum(loss * msk)     # scalar partials for this row tile
    den = jnp.sum(msk)

    # Lane-dense (1, 128) partial outputs -> unmasked stores; every grid step
    # owns its own output block, so the grid axis can be "parallel".
    num_ref[...] = jnp.full(num_ref.shape, num, dtype=jnp.float32)
    den_ref[...] = jnp.full(den_ref.shape, den, dtype=jnp.float32)


def _pick_tile_rows(rows, vocab, itemsize):
    """Largest row tile whose double-buffered logits slab fits the VMEM budget."""
    try:
        vmem_cap = pltpu.get_tpu_info().vmem_capacity_bytes
    except Exception:  # interpret mode / older jax: be conservative (v7x per-TC)
        vmem_cap = 64 * 1024 * 1024
    # Keep 2 (double buffer) x logits tile under ~40% of physical VMEM.
    tile_bytes_budget = int(vmem_cap * 0.4) // 2
    bytes_per_row = max(vocab * itemsize, 1)
    # Minimum sublane granularity per dtype (f32: 8, bf16: 16, int8/fp8: 32).
    sublane = {4: 8, 2: 16, 1: 32}.get(itemsize, 8)
    tr = tile_bytes_budget // bytes_per_row
    tr = max(sublane, (tr // sublane) * sublane)
    tr = min(tr, 2048)  # keep vreg / intermediate pressure sane for tiny vocabs
    # No point tiling past the (sublane-padded) row count.
    rows_padded = ((rows + sublane - 1) // sublane) * sublane
    tr = min(tr, max(rows_padded, sublane))
    return int(tr), int(vmem_cap)


def language_model_criterion(logits, target, mask, *, tile_rows=None):
    """logits: (N, S, V) float; target: (N, S) int; mask: (N, S) float."""
    N, S, V = logits.shape
    # Match the PyTorch slicing semantics.
    target = target[:, :S]
    mask = mask[:, :S]

    rows = N * S
    logits2d = logits.reshape(rows, V)
    tgt2d = target.reshape(rows, 1).astype(jnp.int32)
    msk2d = mask.reshape(rows, 1).astype(jnp.float32)

    itemsize = jnp.dtype(logits.dtype).itemsize
    auto_tr, vmem_cap = _pick_tile_rows(rows, V, itemsize)
    if tile_rows is None:
        tile_rows = auto_tr

    # Pad rows so the grid tiles evenly; padded rows carry mask == 0 and
    # zero-filled logits (keeps the where-select finite -> no NaN leakage).
    pad = (-rows) % tile_rows
    if pad:
        logits2d = jnp.pad(logits2d, ((0, pad), (0, 0)))
        tgt2d = jnp.pad(tgt2d, ((0, pad), (0, 0)))
        msk2d = jnp.pad(msk2d, ((0, pad), (0, 0)))
    total_rows = rows + pad
    num_blocks = total_rows // tile_rows

    num_out, den_out = pl.pallas_call(
        _lm_criterion_kernel,
        out_shape=(
            jax.ShapeDtypeStruct((num_blocks, 128), jnp.float32),
            jax.ShapeDtypeStruct((num_blocks, 128), jnp.float32),
        ),
        grid_spec=pltpu.PrefetchScalarGridSpec(
            num_scalar_prefetch=0,
            grid=(num_blocks,),
            in_specs=[
                pl.BlockSpec((tile_rows, V), lambda i: (i, 0)),
                pl.BlockSpec((tile_rows, 1), lambda i: (i, 0)),
                pl.BlockSpec((tile_rows, 1), lambda i: (i, 0)),
            ],
            out_specs=[
                pl.BlockSpec((1, 128), lambda i: (i, 0)),
                pl.BlockSpec((1, 128), lambda i: (i, 0)),
            ],
        ),
        compiler_params=pltpu.CompilerParams(
            dimension_semantics=("parallel",),
            vmem_limit_bytes=int(vmem_cap * 0.75),
        ),
    )(logits2d, tgt2d, msk2d)

    # Tiny final reduction in plain JAX.  NaN when sum(mask) == 0, matching
    # the PyTorch module's behavior.
    return jnp.sum(num_out[:, 0]) / jnp.sum(den_out[:, 0])


if __name__ == "__main__":
    key = jax.random.PRNGKey(0)
    k1, k2, k3 = jax.random.split(key, 3)

    N, S, V = 2, 8, 32
    # "logits" here are log-probabilities, as expected by NLLLoss.
    raw = jax.random.normal(k1, (N, S, V), dtype=jnp.float32)
    logits = jax.nn.log_softmax(raw, axis=-1)
    target = jax.random.randint(k2, (N, S), 0, V, dtype=jnp.int32)
    mask = (jax.random.uniform(k3, (N, S)) > 0.3).astype(jnp.float32)
    # Ensure mask is not all zero.
    mask = mask.at[0, 0].set(1.0)

    out = language_model_criterion(logits, target, mask)
    out = jax.block_until_ready(out)

    # Pure-JAX reference check.
    loss_ref = -jnp.take_along_axis(logits, target[..., None], axis=-1)[..., 0]
    ref = jnp.sum(loss_ref * mask) / jnp.sum(mask)
    assert jnp.allclose(out, ref, rtol=1e-5, atol=1e-5), (out, ref)

    print("KERNEL_OK")
</pallas_src>

<mosaic_0001>
module attributes {stable_mosaic.version = 11 : i64} {
  func.func @_lm_criterion_kernel(%arg0: i32, %arg1: memref<16x32xf32, #tpu.memory_space<vmem>>, %arg2: memref<16x1xi32, #tpu.memory_space<vmem>>, %arg3: memref<16x1xf32, #tpu.memory_space<vmem>>, %arg4: memref<1x128xf32, #tpu.memory_space<vmem>>, %arg5: memref<1x128xf32, #tpu.memory_space<vmem>>) attributes {dimension_semantics = [#tpu.dimension_semantics<parallel>], iteration_bounds = array<i64: 1>, scalar_prefetch = 0 : i64, scratch_operands = 0 : i64, tpu.core_type = #tpu.core_type<tc>, window_params = [{transform_indices = @transform_0, window_bounds = array<i64: 16, 32>}, {transform_indices = @transform_1, window_bounds = array<i64: 16, 1>}, {transform_indices = @transform_2, window_bounds = array<i64: 16, 1>}, {transform_indices = @transform_3, window_bounds = array<i64: 1, 128>}, {transform_indices = @transform_4, window_bounds = array<i64: 1, 128>}]} {
    %c0 = arith.constant 0 : index
    %c0_0 = arith.constant 0 : index
    %0 = vector.load %arg1[%c0, %c0_0] : memref<16x32xf32, #tpu.memory_space<vmem>>, vector<16x32xf32>
    %c0_1 = arith.constant 0 : index
    %c0_2 = arith.constant 0 : index
    %1 = vector.load %arg2[%c0_1, %c0_2] : memref<16x1xi32, #tpu.memory_space<vmem>>, vector<16x1xi32>
    %c0_3 = arith.constant 0 : index
    %c0_4 = arith.constant 0 : index
    %2 = vector.load %arg3[%c0_3, %c0_4] : memref<16x1xf32, #tpu.memory_space<vmem>>, vector<16x1xf32>
    %3 = tpu.iota {dimensions = array<i32: 1>} : vector<16x32xi32>
    %4 = vector.broadcast %1 : vector<16x1xi32> to vector<16x32xi32>
    %5 = arith.cmpi eq, %3, %4 : vector<16x32xi32>
    %cst = arith.constant 0.000000e+00 : f32
    %6 = vector.broadcast %cst : f32 to vector<16x32xf32>
    %7 = arith.select %5, %0, %6 : vector<16x32xi1>, vector<16x32xf32>
    %cst_5 = arith.constant dense<0.000000e+00> : vector<16xf32>
    %8 = vector.multi_reduction <add>, %7, %cst_5 [1] : vector<16x32xf32> to vector<16xf32>
    %9 = vector.shape_cast %8 : vector<16xf32> to vector<16x1xf32>
    %cst_6 = arith.constant 0.000000e+00 : f32
    %10 = vector.broadcast %cst_6 : f32 to vector<16x1xf32>
    %11 = arith.subf %10, %9 : vector<16x1xf32>
    %12 = arith.mulf %11, %2 : vector<16x1xf32>
    %13 = vector.shape_cast %12 : vector<16x1xf32> to vector<1x16x1xf32>
    %cst_7 = arith.constant dense<0.000000e+00> : vector<1xf32>
    %14 = vector.multi_reduction <add>, %13, %cst_7 [1, 2] : vector<1x16x1xf32> to vector<1xf32>
    %15 = vector.shape_cast %14 : vector<1xf32> to vector<1x1x1xf32>
    %16 = vector.extract %15[0, 0, 0] : f32 from vector<1x1x1xf32>
    %17 = vector.shape_cast %2 : vector<16x1xf32> to vector<1x16x1xf32>
    %cst_8 = arith.constant dense<0.000000e+00> : vector<1xf32>
    %18 = vector.multi_reduction <add>, %17, %cst_8 [1, 2] : vector<1x16x1xf32> to vector<1xf32>
    %19 = vector.shape_cast %18 : vector<1xf32> to vector<1x1x1xf32>
    %20 = vector.extract %19[0, 0, 0] : f32 from vector<1x1x1xf32>
    %21 = vector.broadcast %16 : f32 to vector<1x128xf32>
    %c0_9 = arith.constant 0 : index
    %c0_10 = arith.constant 0 : index
    %22 = vector.load %arg4[%c0_9, %c0_10] : memref<1x128xf32, #tpu.memory_space<vmem>>, vector<1x128xf32>
    tpu.vector_store %arg4[%c0_9, %c0_10], %21 {strides = array<i32>} : memref<1x128xf32, #tpu.memory_space<vmem>>, vector<1x128xf32>,
    %23 = vector.broadcast %20 : f32 to vector<1x128xf32>
    %c0_11 = arith.constant 0 : index
    %c0_12 = arith.constant 0 : index
    %24 = vector.load %arg5[%c0_11, %c0_12] : memref<1x128xf32, #tpu.memory_space<vmem>>, vector<1x128xf32>
    tpu.vector_store %arg5[%c0_11, %c0_12], %23 {strides = array<i32>} : memref<1x128xf32, #tpu.memory_space<vmem>>, vector<1x128xf32>,
    return
  }
  func.func @transform_0(%arg0: i32) -> (i32, i32) {
    %c0_i32 = arith.constant 0 : i32
    %c0_i32_0 = arith.constant 0 : i32
    return %arg0, %c0_i32 : i32, i32
  }
  func.func @transform_1(%arg0: i32) -> (i32, i32) {
    %c0_i32 = arith.constant 0 : i32
    %c0_i32_0 = arith.constant 0 : i32
    return %arg0, %c0_i32 : i32, i32
  }
  func.func @transform_2(%arg0: i32) -> (i32, i32) {
    %c0_i32 = arith.constant 0 : i32
    %c0_i32_0 = arith.constant 0 : i32
    return %arg0, %c0_i32 : i32, i32
  }
  func.func @transform_3(%arg0: i32) -> (i32, i32) {
    %c0_i32 = arith.constant 0 : i32
    %c0_i32_0 = arith.constant 0 : i32
    return %arg0, %c0_i32 : i32, i32
  }
  func.func @transform_4(%arg0: i32) -> (i32, i32) {
    %c0_i32 = arith.constant 0 : i32
    %c0_i32_0 = arith.constant 0 : i32
    return %arg0, %c0_i32 : i32, i32
  }
}

</mosaic_0001>

<llo_original>
// kernel: tpu_custom_call.1
$region0: #{tpu_custom_call.1}
  #allocation0 [shape = 'u32[]', space=smem, size = 0x4, offset = 0x4, fixed_abs, tag = 'smem constant byte address 0x4 - core index']
  #allocation1 [shape = 'u32[72,128]{1,0:T(1,128)}', space=vmem, size = 0x9000, scoped, tag = 'internal scratch']
  %s0 = inlined_call_operand.vmem [shape: f32[16,32], index: 0, kind: input, shape index: {}]
  %s1 = inlined_call_operand.vmem [shape: s32[16,1], index: 1, kind: input, shape index: {}]
  %s2 = inlined_call_operand.vmem [shape: f32[16,1], index: 2, kind: input, shape index: {}]
  %s3 = inlined_call_operand.hbm [shape: f32[1,128], index: 3, kind: output, shape index: {0}]
  %s4 = inlined_call_operand.hbm [shape: f32[1,128], index: 4, kind: output, shape index: {1}]
  %5 = xla_tuple %s3, %s4
  %s6 = sld [smem:[#allocation0]]
  $region30: #{tpu_custom_call.1} parent=0
    _
  %s8 = ssub.s32 1, %s6
  %s9 = scalar_select 0, %s8, %s6
  $region1: #{tpu_custom_call.1} parent=0
    #allocation2 [shape = 'u8[512]{0}', space=vmem, size = 0x400, scoped, tag = 'output window, operand 0, single buffered']
    #allocation3 [shape = 's32[1]{0}', space=sflag, size = 0x4, scoped, tag = 'scoped memory for tpu_custom_call.1']
    #allocation4 [shape = 'u8[512]{0}', space=vmem, size = 0x400, scoped, tag = 'output window, operand 1, single buffered']
    #allocation5 [shape = 's32[1]{0}', space=sflag, size = 0x4, scoped, tag = 'scoped memory for tpu_custom_call.1']
    %10 = vsyncpa [#allocation3], 0
    %11 = vsyncpa [#allocation5], 0
    // Predicated region
    $region2: #{tpu_custom_call.1} parent=1 // pred_check
      _
    $region3: #{tpu_custom_call.1} parent=1 // pred_check_branch
      %13 = sbr.rel (0) target = $region5
    $region4: #{tpu_custom_call.1} parent=1 // pred_region
      _
    $region5: #{tpu_custom_call.1} parent=1 // pred_fallthru
      _
    // Predicated region
    $region6: #{tpu_custom_call.1} parent=1 // pred_check
      _
    $region7: #{tpu_custom_call.1} parent=1 // pred_check_branch
      %15 = sbr.rel (0) target = $region9
    $region8: #{tpu_custom_call.1} parent=1 // pred_region
      _
    $region9: #{tpu_custom_call.1} parent=1 // pred_fallthru
      _
    // Predicated region
    $region10: #{tpu_custom_call.1} parent=1 // pred_check
      _
    $region11: #{tpu_custom_call.1} parent=1 // pred_check_branch
      %17 = sbr.rel (0) target = $region13
    $region12: #{tpu_custom_call.1} parent=1 // pred_region
      _
    $region13: #{tpu_custom_call.1} parent=1 // pred_fallthru
      _
    %v18 = vld [vmem:[%s0] sm:$0xff]
    %v19 = vld [vmem:[%s0 + $0x8] sm:$0xff]
    %v20 = vld [vmem:[%s1] sm:$0xff]
    %v21 = vld [vmem:[%s1 + $0x8] sm:$0xff]
    %v22 = vld [vmem:[%s2] sm:$0xff]
    %v23 = vld [vmem:[%s2 + $0x8] sm:$0xff]
    %v24 = vlaneseq
    %v25 = vand.u32 %v24, 127
    %26 = vset.pattern.permute.xlu0 0
    %27 = vperm.xlu0 %26, %v20
    %v28 = vpop.permute.xlu0 %27
    %29 = vset.pattern.permute.xlu0 0
    %30 = vperm.xlu0 %29, %v21
    %v31 = vpop.permute.xlu0 %30
    %vm32 = vcmp.eq.s32.totalorder %v25, %v28
    %vm33 = vcmp.eq.s32.totalorder %v25, %v31
    %v34 = vsel %vm32, %v18, 0.0
    %v35 = vsel %vm33, %v19, 0.0
    %vm36 = vcmask 261120
    %v37 = vsel %vm36, %v34, 0.0
    %38 = vadd.xlane.f32.xlu0 %v37
    %v39 = vpop.xlane.xlu0 %38
    %v40 = vsel %vm36, %v35, 0.0
    %41 = vadd.xlane.f32.xlu0 %v40
    %v42 = vpop.xlane.xlu0 %41
    %v43 = vsub.f32 0.0, %v39
    %v44 = vsub.f32 0.0, %v42
    %v45 = vmul.f32 %v43, %v22
    %v46 = vmul.f32 %v44, %v23
    %vm47 = vcmask 7168
    %v48 = vsel %vm47, %v45, 0.0
    %v49 = vsel %vm47, %v46, 0.0
    %v50 = vadd.f32 %v48, %v49
    %51 = vadd.xlane.f32.xlu0 %v50
    %v52 = vpop.xlane.xlu0 %51
    %v53 = vrot.slane %v52, 4
    %v54 = vadd.f32 %v52, %v53
    %v55 = vrot.slane %v54, 2
    %v56 = vadd.f32 %v54, %v55
    %v57 = vrot.slane %v56, 1
    %v58 = vadd.f32 %v56, %v57
    %s59 = vtos %v58
    %v60 = vsel %vm47, %v22, 0.0
    %v61 = vsel %vm47, %v23, 0.0
    %v62 = vadd.f32 %v60, %v61
    %63 = vadd.xlane.f32.xlu0 %v62
    %v64 = vpop.xlane.xlu0 %63
    %v65 = vrot.slane %v64, 4
    %v66 = vadd.f32 %v64, %v65
    %v67 = vrot.slane %v66, 2
    %v68 = vadd.f32 %v66, %v67
    %v69 = vrot.slane %v68, 1
    %v70 = vadd.f32 %v68, %v69
    %s71 = vtos %v70
    %v72 = vstv %s59
    %73 = vst [vmem:[#allocation2] sm:$0x1] %v72
    %v74 = vstv %s71
    %75 = vst [vmem:[#allocation4] sm:$0x1] %v74
    // Predicated region
    $region14: #{tpu_custom_call.1} parent=1 // pred_check
      _
    $region15: #{tpu_custom_call.1} parent=1 // pred_check_branch
      %77 = sbr.rel (0) target = $region17
    $region16: #{tpu_custom_call.1} parent=1 // pred_region
      %79 = vsyncadd [#allocation3], 0
      %s81 = sshll.u32 [#allocation2], 4
      %s82 = int_to_ptr.vmem [resolvable:$true] %s81
      %s83 = sshll.u32 %s3, 4
      %s84 = int_to_ptr.hbm [resolvable:$true] %s83
      %86 = dma.vmem_to_hbm [thread:$0]  %s82, 16, %s84, [#allocation3]
    $region17: #{tpu_custom_call.1} parent=1 // pred_fallthru
      _
    // Predicated region
    $region18: #{tpu_custom_call.1} parent=1 // pred_check
      _
    $region19: #{tpu_custom_call.1} parent=1 // pred_check_branch
      %88 = sbr.rel (0) target = $region21
    $region20: #{tpu_custom_call.1} parent=1 // pred_region
      %90 = vsyncadd [#allocation5], 0
      %s92 = sshll.u32 [#allocation4], 4
      %s93 = int_to_ptr.vmem [resolvable:$true] %s92
      %s94 = sshll.u32 %s4, 4
      %s95 = int_to_ptr.hbm [resolvable:$true] %s94
      %97 = dma.vmem_to_hbm [thread:$0]  %s93, 16, %s95, [#allocation5]
    $region21: #{tpu_custom_call.1} parent=1 // pred_fallthru
      _
    // Predicated region
    $region22: #{tpu_custom_call.1} parent=1 // pred_check
      _
    $region23: #{tpu_custom_call.1} parent=1 // pred_check_branch
      %99 = sbr.rel (0) target = $region25
    $region24: #{tpu_custom_call.1} parent=1 // pred_region
      %101 = dma.done [#allocation3], 16
    $region25: #{tpu_custom_call.1} parent=1 // pred_fallthru
      _
    // Predicated region
    $region26: #{tpu_custom_call.1} parent=1 // pred_check
      _
    $region27: #{tpu_custom_call.1} parent=1 // pred_check_branch
      %103 = sbr.rel (0) target = $region29
    $region28: #{tpu_custom_call.1} parent=1 // pred_region
      %105 = dma.done [#allocation5], 16
    $region29: #{tpu_custom_call.1} parent=1 // pred_fallthru
      _
    %106 = vsyncpa [#allocation3], 1
    %107 = vsyncpa [#allocation5], 1

</llo_original>
